<compile_context>
chip_gen: v7x
topology: tpu7x:2x2x1
jax: 0.10.0
libtpu: 0.0.40
codegen_flags: <defaults>
</compile_context>

<pallas_src>
import functools

import jax
import jax.numpy as jnp
from jax.experimental import pallas as pl
from jax.experimental.pallas import tpu as pltpu


def _output_transition_kernel(x_ref, w_ref, b_ref, o_ref, *, normalization, n_chans):
    x = x_ref[...].astype(jnp.float32)        # (C, tS)  spatial on lanes
    w = w_ref[...].astype(jnp.float32)        # (L, C)   resident, tiny
    b = b_ref[...].astype(jnp.float32)        # (L, 1)
    # 1x1x1 Conv3d == per-voxel channel contraction.  Unrolled VPU FMAs (see
    # header): C is a small compile-time constant, so this is a short static loop.
    acc = w[:, 0:1] * x[0:1, :]               # (L,1)*(1,tS) -> (L,tS)
    for c in range(1, n_chans):
        acc = acc + w[:, c:c + 1] * x[c:c + 1, :]
    s = acc + b                                # (L, tS)
    if normalization == "softmax":
        # PyTorch Softmax(dim=1) == softmax over the L (sublane) axis per voxel.
        m = jnp.max(s, axis=0, keepdims=True)
        e = jnp.exp(s - m)
        denom = jnp.sum(e, axis=0, keepdims=True)
        s = e * pl.reciprocal(denom, approx=False)
    elif normalization == "sigmoid":
        s = jax.nn.sigmoid(s)
    # else: identity
    o_ref[...] = s.astype(o_ref.dtype)


def _pick_spatial_tile(S, C, L, N, itemsize):
    """Pick a lane tile tS and (possibly padded) length Sp so the grid divides."""
    # Per-lane VMEM footprint of one grid step:
    #   double-buffered in/out blocks + f32 intermediates (x upcast, logits, exp).
    bytes_per_lane = 2 * (C + L) * itemsize + (C + 3 * L) * 4
    vmem_budget = 16 * 1024 * 1024            # safe even on v7x (64 MiB VMEM)
    cap = max(128, (vmem_budget // bytes_per_lane) // 128 * 128)
    max_tile = min(65536, cap)

    if S <= max_tile:
        tS, Sp = S, S                         # single tile per batch element
    else:
        tS = 0
        t = (max_tile // 128) * 128
        floor = max(128, (max_tile // 4) // 128 * 128)
        while t >= floor:                     # exact divisor of S, but never tiny
            if S % t == 0:
                tS = t
                break
            t -= 128
        if tS == 0:
            tS = (max_tile // 128) * 128      # rare fallback: pad the ragged tail
        Sp = pl.cdiv(S, tS) * tS

    # Grid balance for v7x's 2 TensorCores / pipelining: aim for >= 8 grid steps,
    # but never shrink below 2048 lanes (that's the overhead-dominated regime).
    min_grid_steps = 8
    while (N * (Sp // tS) < min_grid_steps
           and tS % 2 == 0
           and (tS // 2) >= 2048
           and (tS // 2) % 128 == 0
           and Sp % (tS // 2) == 0):
        tS //= 2
    return tS, Sp


def output_transition(x, weight, bias, normalization="softmax"):
    """x: (N, C, D, H, W); weight: (L, C, 1, 1, 1); bias: (L,) -> (N, L, D, H, W)."""
    N, C, D, H, W = x.shape
    L = weight.shape[0]
    S = D * H * W
    itemsize = x.dtype.itemsize

    # NCDHW -> (N, C, S): contiguous reshape, no HBM transpose.
    x3 = x.reshape(N, C, S)

    tS, Sp = _pick_spatial_tile(S, C, L, N, itemsize)
    if Sp != S:
        # Rare fallback (awkward S with no decent divisor): one extra HBM pass
        # each way.  The divisor search above avoids this for typical UNet shapes.
        x3 = jnp.pad(x3, ((0, 0), (0, 0), (0, Sp - S)))

    w2 = weight.reshape(L, C)                 # (L, C)
    b2 = bias.reshape(L, 1)                   # (L, 1) -> broadcasts over lanes

    kernel = functools.partial(_output_transition_kernel,
                               normalization=normalization, n_chans=C)

    trans = N * S * L if normalization in ("softmax", "sigmoid") else 0
    cost = pl.CostEstimate(
        flops=2 * N * S * L * C,
        transcendentals=trans,
        bytes_accessed=N * S * (C + L) * itemsize + (L * C + L) * 4,
    )

    out3 = pl.pallas_call(
        kernel,
        out_shape=jax.ShapeDtypeStruct((N, L, Sp), x.dtype),
        grid_spec=pltpu.PrefetchScalarGridSpec(
            num_scalar_prefetch=0,
            grid=(N, Sp // tS),
            in_specs=[
                pl.BlockSpec((pl.Squeezed(), C, tS), lambda n, s: (n, 0, s)),
                pl.BlockSpec((L, C), lambda n, s: (0, 0)),   # constant -> resident
                pl.BlockSpec((L, 1), lambda n, s: (0, 0)),   # constant -> resident
            ],
            out_specs=pl.BlockSpec((pl.Squeezed(), L, tS), lambda n, s: (n, 0, s)),
        ),
        compiler_params=pltpu.CompilerParams(
            dimension_semantics=("parallel", "parallel"),
            vmem_limit_bytes=32 * 1024 * 1024,
        ),
        cost_estimate=cost,
    )(x3, w2, b2)

    if Sp != S:
        out3 = out3[:, :, :S]
    return out3.reshape(N, L, D, H, W)


def _reference(x, weight, bias, normalization):
    # Pure-JAX reference of the PyTorch forward (exact-f32 matmul precision so the
    # reference itself isn't a bf16 single-pass approximation).
    w2 = weight.reshape(weight.shape[0], weight.shape[1]).astype(jnp.float32)
    out = jnp.einsum("ncdhw,lc->nldhw", x.astype(jnp.float32), w2,
                     precision=jax.lax.Precision.HIGHEST)
    out = out + bias.astype(jnp.float32)[None, :, None, None, None]
    if normalization == "softmax":
        out = jax.nn.softmax(out, axis=1)
    elif normalization == "sigmoid":
        out = jax.nn.sigmoid(out)
    return out.astype(x.dtype)


if __name__ == "__main__":
    # Small, deterministic example consistent with the module:
    # OutputTransition(inChans=8, n_labels=4, normalization='softmax')
    N, C, L = 2, 8, 4
    D = H = W = 8
    normalization = "softmax"

    key = jax.random.PRNGKey(0)
    kx, kw, kb = jax.random.split(key, 3)

    x = jax.random.normal(kx, (N, C, D, H, W), dtype=jnp.float32)

    # Deterministic Conv3d-style init: weight (L, C, 1, 1, 1), bias (L,)
    fan_in = C * 1 * 1 * 1
    bound = 1.0 / (fan_in ** 0.5)
    weight = jax.random.uniform(kw, (L, C, 1, 1, 1), dtype=jnp.float32,
                                minval=-bound, maxval=bound)
    bias = jax.random.uniform(kb, (L,), dtype=jnp.float32,
                              minval=-bound, maxval=bound)

    out = output_transition(x, weight, bias, normalization=normalization)
    out = jax.block_until_ready(out)

    ref = _reference(x, weight, bias, normalization)
    assert out.shape == (N, L, D, H, W)
    assert jnp.allclose(out, ref, atol=1e-5, rtol=1e-5)

    print("KERNEL_OK")
</pallas_src>

<mosaic_0001>
module attributes {stable_mosaic.version = 11 : i64} {
  func.func @_output_transition_kernel(%arg0: i32, %arg1: i32, %arg2: memref<1x8x512xf32, #tpu.memory_space<vmem>>, %arg3: memref<4x8xf32, #tpu.memory_space<vmem>>, %arg4: memref<4x1xf32, #tpu.memory_space<vmem>>, %arg5: memref<1x4x512xf32, #tpu.memory_space<vmem>>) attributes {dimension_semantics = [#tpu.dimension_semantics<parallel>, #tpu.dimension_semantics<parallel>], iteration_bounds = array<i64: 2, 1>, scalar_prefetch = 0 : i64, scratch_operands = 0 : i64, tpu.core_type = #tpu.core_type<tc>, window_params = [{transform_indices = @transform_0, window_bounds = array<i64: 1, 8, 512>}, {pipeline_mode = #tpu.pipeline_mode<synchronous>, transform_indices = @transform_1, window_bounds = array<i64: 4, 8>}, {pipeline_mode = #tpu.pipeline_mode<synchronous>, transform_indices = @transform_2, window_bounds = array<i64: 4, 1>}, {transform_indices = @transform_3, window_bounds = array<i64: 1, 4, 512>}]} {
    %c0 = arith.constant 0 : index
    %c0_0 = arith.constant 0 : index
    %c0_1 = arith.constant 0 : index
    %0 = vector.load %arg2[%c0, %c0_0, %c0_1] : memref<1x8x512xf32, #tpu.memory_space<vmem>>, vector<1x8x512xf32>
    %1 = vector.shape_cast %0 : vector<1x8x512xf32> to vector<8x512xf32>
    %c0_2 = arith.constant 0 : index
    %c0_3 = arith.constant 0 : index
    %2 = vector.load %arg3[%c0_2, %c0_3] : memref<4x8xf32, #tpu.memory_space<vmem>>, vector<4x8xf32>
    %c0_4 = arith.constant 0 : index
    %c0_5 = arith.constant 0 : index
    %3 = vector.load %arg4[%c0_4, %c0_5] : memref<4x1xf32, #tpu.memory_space<vmem>>, vector<4x1xf32>
    %4 = vector.extract_strided_slice %2 {offsets = [0, 0], sizes = [4, 1], strides = [1, 1]} : vector<4x8xf32> to vector<4x1xf32>
    %5 = vector.extract_strided_slice %1 {offsets = [0, 0], sizes = [1, 512], strides = [1, 1]} : vector<8x512xf32> to vector<1x512xf32>
    %6 = vector.broadcast %4 : vector<4x1xf32> to vector<4x512xf32>
    %7 = vector.broadcast %5 : vector<1x512xf32> to vector<4x512xf32>
    %8 = arith.mulf %6, %7 : vector<4x512xf32>
    %9 = vector.extract_strided_slice %2 {offsets = [0, 1], sizes = [4, 1], strides = [1, 1]} : vector<4x8xf32> to vector<4x1xf32>
    %10 = vector.extract_strided_slice %1 {offsets = [1, 0], sizes = [1, 512], strides = [1, 1]} : vector<8x512xf32> to vector<1x512xf32>
    %11 = vector.broadcast %9 : vector<4x1xf32> to vector<4x512xf32>
    %12 = vector.broadcast %10 : vector<1x512xf32> to vector<4x512xf32>
    %13 = arith.mulf %11, %12 : vector<4x512xf32>
    %14 = arith.addf %8, %13 : vector<4x512xf32>
    %15 = vector.extract_strided_slice %2 {offsets = [0, 2], sizes = [4, 1], strides = [1, 1]} : vector<4x8xf32> to vector<4x1xf32>
    %16 = vector.extract_strided_slice %1 {offsets = [2, 0], sizes = [1, 512], strides = [1, 1]} : vector<8x512xf32> to vector<1x512xf32>
    %17 = vector.broadcast %15 : vector<4x1xf32> to vector<4x512xf32>
    %18 = vector.broadcast %16 : vector<1x512xf32> to vector<4x512xf32>
    %19 = arith.mulf %17, %18 : vector<4x512xf32>
    %20 = arith.addf %14, %19 : vector<4x512xf32>
    %21 = vector.extract_strided_slice %2 {offsets = [0, 3], sizes = [4, 1], strides = [1, 1]} : vector<4x8xf32> to vector<4x1xf32>
    %22 = vector.extract_strided_slice %1 {offsets = [3, 0], sizes = [1, 512], strides = [1, 1]} : vector<8x512xf32> to vector<1x512xf32>
    %23 = vector.broadcast %21 : vector<4x1xf32> to vector<4x512xf32>
    %24 = vector.broadcast %22 : vector<1x512xf32> to vector<4x512xf32>
    %25 = arith.mulf %23, %24 : vector<4x512xf32>
    %26 = arith.addf %20, %25 : vector<4x512xf32>
    %27 = vector.extract_strided_slice %2 {offsets = [0, 4], sizes = [4, 1], strides = [1, 1]} : vector<4x8xf32> to vector<4x1xf32>
    %28 = vector.extract_strided_slice %1 {offsets = [4, 0], sizes = [1, 512], strides = [1, 1]} : vector<8x512xf32> to vector<1x512xf32>
    %29 = vector.broadcast %27 : vector<4x1xf32> to vector<4x512xf32>
    %30 = vector.broadcast %28 : vector<1x512xf32> to vector<4x512xf32>
    %31 = arith.mulf %29, %30 : vector<4x512xf32>
    %32 = arith.addf %26, %31 : vector<4x512xf32>
    %33 = vector.extract_strided_slice %2 {offsets = [0, 5], sizes = [4, 1], strides = [1, 1]} : vector<4x8xf32> to vector<4x1xf32>
    %34 = vector.extract_strided_slice %1 {offsets = [5, 0], sizes = [1, 512], strides = [1, 1]} : vector<8x512xf32> to vector<1x512xf32>
    %35 = vector.broadcast %33 : vector<4x1xf32> to vector<4x512xf32>
    %36 = vector.broadcast %34 : vector<1x512xf32> to vector<4x512xf32>
    %37 = arith.mulf %35, %36 : vector<4x512xf32>
    %38 = arith.addf %32, %37 : vector<4x512xf32>
    %39 = vector.extract_strided_slice %2 {offsets = [0, 6], sizes = [4, 1], strides = [1, 1]} : vector<4x8xf32> to vector<4x1xf32>
    %40 = vector.extract_strided_slice %1 {offsets = [6, 0], sizes = [1, 512], strides = [1, 1]} : vector<8x512xf32> to vector<1x512xf32>
    %41 = vector.broadcast %39 : vector<4x1xf32> to vector<4x512xf32>
    %42 = vector.broadcast %40 : vector<1x512xf32> to vector<4x512xf32>
    %43 = arith.mulf %41, %42 : vector<4x512xf32>
    %44 = arith.addf %38, %43 : vector<4x512xf32>
    %45 = vector.extract_strided_slice %2 {offsets = [0, 7], sizes = [4, 1], strides = [1, 1]} : vector<4x8xf32> to vector<4x1xf32>
    %46 = vector.extract_strided_slice %1 {offsets = [7, 0], sizes = [1, 512], strides = [1, 1]} : vector<8x512xf32> to vector<1x512xf32>
    %47 = vector.broadcast %45 : vector<4x1xf32> to vector<4x512xf32>
    %48 = vector.broadcast %46 : vector<1x512xf32> to vector<4x512xf32>
    %49 = arith.mulf %47, %48 : vector<4x512xf32>
    %50 = arith.addf %44, %49 : vector<4x512xf32>
    %51 = vector.broadcast %3 : vector<4x1xf32> to vector<4x512xf32>
    %52 = arith.addf %50, %51 : vector<4x512xf32>
    %cst = arith.constant dense<0xFF800000> : vector<512xf32>
    %53 = vector.multi_reduction <maximumf>, %52, %cst [0] : vector<4x512xf32> to vector<512xf32>
    %54 = vector.shape_cast %53 : vector<512xf32> to vector<1x512xf32>
    %55 = vector.broadcast %54 : vector<1x512xf32> to vector<4x512xf32>
    %56 = arith.subf %52, %55 : vector<4x512xf32>
    %57 = math.exp %56 : vector<4x512xf32>
    %cst_6 = arith.constant dense<0.000000e+00> : vector<512xf32>
    %58 = vector.multi_reduction <add>, %57, %cst_6 [0] : vector<4x512xf32> to vector<512xf32>
    %59 = vector.shape_cast %58 : vector<512xf32> to vector<1x512xf32>
    %60 = tpu.reciprocal %59 : vector<1x512xf32> -> vector<1x512xf32>
    %61 = vector.broadcast %60 : vector<1x512xf32> to vector<4x512xf32>
    %62 = arith.mulf %57, %61 : vector<4x512xf32>
    %c0_7 = arith.constant 0 : index
    %c0_8 = arith.constant 0 : index
    %c0_9 = arith.constant 0 : index
    %63 = vector.load %arg5[%c0_7, %c0_8, %c0_9] : memref<1x4x512xf32, #tpu.memory_space<vmem>>, vector<1x4x512xf32>
    %64 = vector.shape_cast %63 : vector<1x4x512xf32> to vector<4x512xf32>
    %65 = vector.shape_cast %62 : vector<4x512xf32> to vector<1x4x512xf32>
    tpu.vector_store %arg5[%c0_7, %c0_8, %c0_9], %65 {strides = array<i32>} : memref<1x4x512xf32, #tpu.memory_space<vmem>>, vector<1x4x512xf32>,
    return
  }
  func.func @transform_0(%arg0: i32, %arg1: i32) -> (i32, i32, i32) {
    %c0_i32 = arith.constant 0 : i32
    %c0_i32_0 = arith.constant 0 : i32
    return %arg0, %c0_i32, %arg1 : i32, i32, i32
  }
  func.func @transform_1(%arg0: i32, %arg1: i32) -> (i32, i32) {
    %c0_i32 = arith.constant 0 : i32
    %c0_i32_0 = arith.constant 0 : i32
    %c0_i32_1 = arith.constant 0 : i32
    return %c0_i32, %c0_i32_0 : i32, i32
  }
  func.func @transform_2(%arg0: i32, %arg1: i32) -> (i32, i32) {
    %c0_i32 = arith.constant 0 : i32
    %c0_i32_0 = arith.constant 0 : i32
    %c0_i32_1 = arith.constant 0 : i32
    return %c0_i32, %c0_i32_0 : i32, i32
  }
  func.func @transform_3(%arg0: i32, %arg1: i32) -> (i32, i32, i32) {
    %c0_i32 = arith.constant 0 : i32
    %c0_i32_0 = arith.constant 0 : i32
    return %arg0, %c0_i32, %arg1 : i32, i32, i32
  }
}

</mosaic_0001>

<llo_original>
// kernel: tpu_custom_call.1
$region0: #{tpu_custom_call.1}
  #allocation0 [shape = 'u32[]', space=smem, size = 0x4, offset = 0x4, fixed_abs, tag = 'smem constant byte address 0x4 - core index']
  #allocation1 [shape = 'u32[144,128]{1,0:T(1,128)}', space=vmem, size = 0x12000, scoped, tag = 'internal scratch']
  %s0 = inlined_call_operand.hbm [shape: f32[2,8,512], index: 0, kind: input, shape index: {}]
  %s1 = inlined_call_operand.vmem [shape: f32[4,8], index: 1, kind: input, shape index: {}]
  %s2 = inlined_call_operand.vmem [shape: f32[4,1], index: 2, kind: input, shape index: {}]
  %s3 = inlined_call_operand.hbm [shape: f32[2,4,512], index: 3, kind: output, shape index: {}]
  %s4 = sld [smem:[#allocation0]]
  $region49: #{tpu_custom_call.1} parent=0
    _
  %s6 = ssub.s32 1, %s4
  %s7 = scalar_select 0, %s6, %s4
  $region1: #{tpu_custom_call.1} parent=0
    #allocation2 [shape = 'u8[32768]{0}', space=vmem, size = 0x8000, scoped, tag = 'input window, operand 0']
    #allocation3 [shape = 's32[2]{0}', space=sflag, size = 0x8, scoped, tag = 'scoped memory for tpu_custom_call.1']
    #allocation4 [shape = 's32[2]{0}', space=sflag, size = 0x8, scoped, tag = 'scoped memory for tpu_custom_call.1']
    #allocation5 [shape = 'u8[16384]{0}', space=vmem, size = 0x4000, scoped, tag = 'output window, operand 0']
    %8 = vsyncpa [#allocation3], 0
    %s9 = scalar_lea.sflag [#allocation3], 1
    %10 = vsyncpa %s9, 0
    %11 = vsyncpa [#allocation4], 0
    %s12 = scalar_lea.sflag [#allocation4], 1
    %13 = vsyncpa %s12, 0
    loop: start=0, step=1, limit=4
    $region2: #{tpu_custom_call.1} parent=1 // loop_pre_header
      _
    $region3: #{tpu_custom_call.1} parent=1 // loop_header
      %s15 = sphi 0, %s19
      %p16 = scmp.ge.s32.totalorder %s15, 4
      %s22 = sphi 0, %s34
      %s23 = sphi 0, %s30
      %s24 = sphi 0, %s22
      %s25 = sphi 0, %s23
      %s26 = sphi 0, %s24
      %s27 = sphi 0, %s25
      %s39 = sphi 0, %s41
      %s42 = sphi 0, %s39
      %s43 = sphi 0, %s42
      %s59 = sphi 0, %s43
      %s63 = sphi 0, %s63
      %s65 = sphi 0, %s63
      %s66 = sphi 0, %s65
      %s80 = sphi 0, %s66
      %s84 = sphi 0, %s84
      %s86 = sphi 0, %s84
      %s87 = sphi 0, %s86
      %s101 = sphi 0, %s87
      %s109 = sphi 0, %s111
      %s112 = sphi 0, %s109
      %s113 = sphi 0, %s112
      %s129 = sphi 0, %s113
    $region4: #{tpu_custom_call.1} parent=1 // loop_header_branch
      %18 = sbr.rel (%p16) target = $region8
    $region5: #{tpu_custom_call.1} parent=1 // loop_body
      %s20 = ssub.s32 %s15, 1
      %s21 = ssub.s32 %s15, 2
      %s28 = sadd.s32 1, %s23
      %p29 = scmp.ge.s32.totalorder %s28, 1
      %s30 = scalar_select %p29, 0, %s28
      %s31 = sadd.s32 1, %s22
      %s32 = scalar_select %p29, %s31, %s22
      %p33 = scmp.ge.s32.totalorder %s32, 2
      %s34 = scalar_select %p33, 0, %s32
      %s35 = ssub.s32 %s22, %s34
      %s36 = ssub.s32 %s23, %s30
      %s37 = sor.u32 %s35, %s36
      %p38 = scmp.eq.s32.totalorder %s37, 0
      %s40 = sadd.s32 %s39, 1
      %s41 = scalar_select %p38, %s39, %s40
      %p44 = pneg %p38
      %p45 = scmp.eq.s32.totalorder %s15, 1
      %p46 = por %p44, %p45
      %p47 = scmp.ne.s32.totalorder %s39, %s42
      %p48 = scmp.eq.s32.totalorder %s15, 0
      %p49 = por %p47, %p48
      %p50 = scmp.ne.s32.totalorder %s39, %s42
      %p51 = scmp.eq.s32.totalorder %s20, 1
      %p52 = por %p50, %p51
      %p53 = scmp.ne.s32.totalorder %s42, %s43
      %p54 = scmp.eq.s32.totalorder %s20, 0
      %p55 = por %p53, %p54
      %p56 = scmp.ne.s32.totalorder %s42, %s43
      %p57 = scmp.eq.s32.totalorder %s21, 1
      %p58 = por %p56, %p57
      %p60 = scmp.ne.s32.totalorder %s43, %s59
      %p61 = scmp.eq.s32.totalorder %s21, 0
      %p62 = por %p60, %p61
      %s64 = sadd.s32 %s63, 1
      %p67 = scmp.eq.s32.totalorder %s15, 1
      %p68 = scmp.ne.s32.totalorder %s63, %s65
      %p69 = scmp.eq.s32.totalorder %s15, 0
      %p70 = por %p68, %p69
      %p71 = scmp.ne.s32.totalorder %s63, %s65
      %p72 = scmp.eq.s32.totalorder %s20, 1
      %p73 = por %p71, %p72
      %p74 = scmp.ne.s32.totalorder %s65, %s66
      %p75 = scmp.eq.s32.totalorder %s20, 0
      %p76 = por %p74, %p75
      %p77 = scmp.ne.s32.totalorder %s65, %s66
      %p78 = scmp.eq.s32.totalorder %s21, 1
      %p79 = por %p77, %p78
      %p81 = scmp.ne.s32.totalorder %s66, %s80
      %p82 = scmp.eq.s32.totalorder %s21, 0
      %p83 = por %p81, %p82
      %s85 = sadd.s32 %s84, 1
      %p88 = scmp.eq.s32.totalorder %s15, 1
      %p89 = scmp.ne.s32.totalorder %s84, %s86
      %p90 = scmp.eq.s32.totalorder %s15, 0
      %p91 = por %p89, %p90
      %p92 = scmp.ne.s32.totalorder %s84, %s86
      %p93 = scmp.eq.s32.totalorder %s20, 1
      %p94 = por %p92, %p93
      %p95 = scmp.ne.s32.totalorder %s86, %s87
      %p96 = scmp.eq.s32.totalorder %s20, 0
      %p97 = por %p95, %p96
      %p98 = scmp.ne.s32.totalorder %s86, %s87
      %p99 = scmp.eq.s32.totalorder %s21, 1
      %p100 = por %p98, %p99
      %p102 = scmp.ne.s32.totalorder %s87, %s101
      %p103 = scmp.eq.s32.totalorder %s21, 0
      %p104 = por %p102, %p103
      %s105 = ssub.s32 %s22, %s34
      %s106 = ssub.s32 %s23, %s30
      %s107 = sor.u32 %s105, %s106
      %p108 = scmp.eq.s32.totalorder %s107, 0
      %s110 = sadd.s32 %s109, 1
      %s111 = scalar_select %p108, %s109, %s110
      %p114 = pneg %p108
      %p115 = scmp.eq.s32.totalorder %s15, 1
      %p116 = por %p114, %p115
      %p117 = scmp.ne.s32.totalorder %s109, %s112
      %p118 = scmp.eq.s32.totalorder %s15, 0
      %p119 = por %p117, %p118
      %p120 = scmp.ne.s32.totalorder %s109, %s112
      %p121 = scmp.eq.s32.totalorder %s20, 1
      %p122 = por %p120, %p121
      %p123 = scmp.ne.s32.totalorder %s112, %s113
      %p124 = scmp.eq.s32.totalorder %s20, 0
      %p125 = por %p123, %p124
      %p126 = scmp.ne.s32.totalorder %s112, %s113
      %p127 = scmp.eq.s32.totalorder %s21, 1
      %p128 = por %p126, %p127
      %p130 = scmp.ne.s32.totalorder %s113, %s129
      %p131 = scmp.eq.s32.totalorder %s21, 0
      %p132 = por %p130, %p131
      %p133 = scmp.le.s32.totalorder 1, %s15
      %p134 = scmp.lt.s32.totalorder %s15, 3
      %p135 = pnand %p133, %p134
      %p136 = pneg %p135
      // Predicated region
      $region9: #{tpu_custom_call.1} parent=5 // pred_check
        _
      $region10: #{tpu_custom_call.1} parent=5 // pred_check_branch
        %138 = sbr.rel (%p135) target = $region12
      $region11: #{tpu_custom_call.1} parent=5 // pred_region
        %s139 = ssub.s32 %s15, 1
        // Predicated region
        $region13: #{tpu_custom_call.1} parent=11 // pred_check
          %p140 = pneg %p76
        $region14: #{tpu_custom_call.1} parent=11 // pred_check_branch
          %142 = sbr.rel (%p140) target = $region16
        $region15: #{tpu_custom_call.1} parent=11 // pred_region
          _
        $region16: #{tpu_custom_call.1} parent=11 // pred_fallthru
          _
        // Predicated region
        $region17: #{tpu_custom_call.1} parent=11 // pred_check
          %p143 = pneg %p97
        $region18: #{tpu_custom_call.1} parent=11 // pred_check_branch
          %145 = sbr.rel (%p143) target = $region20
        $region19: #{tpu_custom_call.1} parent=11 // pred_region
          _
        $region20: #{tpu_custom_call.1} parent=11 // pred_fallthru
          _
      $region12: #{tpu_custom_call.1} parent=5 // pred_fallthru
        _
      %p146 = scmp.lt.s32.totalorder %s15, 2
      // Predicated region
      $region21: #{tpu_custom_call.1} parent=5 // pred_check
        %p147 = pneg %p146
      $region22: #{tpu_custom_call.1} parent=5 // pred_check_branch
        %149 = sbr.rel (%p147) target = $region24
      $region23: #{tpu_custom_call.1} parent=5 // pred_region
        // Predicated region
        $region25: #{tpu_custom_call.1} parent=23 // pred_check
          %p150 = pneg %p49
        $region26: #{tpu_custom_call.1} parent=23 // pred_check_branch
          %152 = sbr.rel (%p150) target = $region28
        $region27: #{tpu_custom_call.1} parent=23 // pred_region
          %s153 = sand.u32 %s39, 1
          %s154 = scalar_lea.sflag [#allocation3], %s153
          %s155 = sand.u32 %s39, 1
          %s156 = smul.addr %s155, 32
          %s157 = scalar_lea.vmem [#allocation2], %s156
          %s158 = smul.u32 4, %s23
          %s160 = ssub.s32 512, 512
          %161 = vsyncadd %s154, %s160
          %s162 = smul.addr %s22, 4
          %s163 = sadd.s32 %s158, %s162
          %s164 = smul.addr %s163, 128
          %s165 = scalar_lea.hbm %s0, %s164
          %s167 = sshll.u32 %s157, 4
          %s168 = int_to_ptr.vmem [resolvable:$true] %s167
          %170 = dma.hbm_to_vmem [thread:$0]  %s165, 512, %s168, %s154
        $region28: #{tpu_custom_call.1} parent=23 // pred_fallthru
          _
      $region24: #{tpu_custom_call.1} parent=5 // pred_fallthru
        _
      %p171 = scmp.le.s32.totalorder 1, %s15
      %p172 = scmp.lt.s32.totalorder %s15, 3
      %p173 = pnand %p171, %p172
      %p174 = pneg %p173
      // Predicated region
      $region29: #{tpu_custom_call.1} parent=5 // pred_check
        _
      $region30: #{tpu_custom_call.1} parent=5 // pred_check_branch
        %176 = sbr.rel (%p173) target = $region32
      $region31: #{tpu_custom_call.1} parent=5 // pred_region
        %s177 = ssub.s32 %s15, 1
        %s178 = sand.u32 %s42, 1
        %s179 = scalar_lea.sflag [#allocation3], %s178
        %s180 = sand.u32 %s42, 1
        %s181 = smul.addr %s180, 32
        %s182 = scalar_lea.vmem [#allocation2], %s181
        // Predicated region
        $region33: #{tpu_custom_call.1} parent=31 // pred_check
          %p183 = pneg %p55
        $region34: #{tpu_custom_call.1} parent=31 // pred_check_branch
          %185 = sbr.rel (%p183) target = $region36
        $region35: #{tpu_custom_call.1} parent=31 // pred_region
          %186 = dma.done %s179, 512
        $region36: #{tpu_custom_call.1} parent=31 // pred_fallthru
          _
        %s187 = sand.u32 %s42, 1
        %s188 = scalar_lea.sflag [#allocation3], %s187
        %s189 = sand.u32 %s42, 1
        %s190 = smul.addr %s189, 32
        %s191 = scalar_lea.vmem [#allocation2], %s190
        %p192 = pneg %p55
        %p193 = pneg %p52
        %p194 = pneg %p76
        %p195 = pneg %p73
        %p196 = pneg %p97
        %p197 = pneg %p94
        %p198 = pneg %p125
        %p199 = pneg %p122
        %s200 = sand.u32 %s112, 1
        %s201 = scalar_lea.sflag [#allocation4], %s200
        %s202 = sand.u32 %s112, 1
        %s203 = smul.addr %s202, 16
        %s204 = scalar_lea.vmem [#allocation5], %s203
        %s205 = smul.u32 4, %s25
        %s206 = smul.u32 4, %s25
        %v207 = vld [vmem:[%s182] sm:$0xff]
        %v208 = vld [vmem:[%s182 + $0x8] sm:$0xff]
        %v209 = vld [vmem:[%s182 + $0x10] sm:$0xff]
        %v210 = vld [vmem:[%s182 + $0x18] sm:$0xff]
        %v211 = vld [vmem:[%s1] sm:$0xf]
        %v212 = vld [vmem:[%s2] sm:$0xf]
        %214 = vset.pattern.permute.xlu0 0
        %215 = vperm.xlu0 %214, %v211
        %v216 = vpop.permute.xlu0 %215
        %v218 = vlaneseq
        %v219 = vshrl.u32 %v218, 7
        %v220 = vsub.s32 0, %v219
        %v221 = vrot.slane %v207, %v220
        %v222 = vlaneseq
        %v223 = vshrl.u32 %v222, 7
        %v224 = vsub.s32 0, %v223
        %v225 = vrot.slane %v208, %v224
        %v226 = vlaneseq
        %v227 = vshrl.u32 %v226, 7
        %v228 = vsub.s32 0, %v227
        %v229 = vrot.slane %v209, %v228
        %v230 = vlaneseq
        %v231 = vshrl.u32 %v230, 7
        %v232 = vsub.s32 0, %v231
        %v233 = vrot.slane %v210, %v232
        %v234 = vmul.f32 %v216, %v221
        %v235 = vmul.f32 %v216, %v225
        %v236 = vmul.f32 %v216, %v229
        %v237 = vmul.f32 %v216, %v233
        %238 = vset.pattern.permute.xlu0 1
        %239 = vperm.xlu0 %238, %v211
        %v240 = vpop.permute.xlu0 %239
        %v242 = vlaneseq
        %v243 = vshrl.u32 %v242, 7
        %v244 = vsub.s32 1, %v243
        %v245 = vrot.slane %v207, %v244
        %v246 = vlaneseq
        %v247 = vshrl.u32 %v246, 7
        %v248 = vsub.s32 1, %v247
        %v249 = vrot.slane %v208, %v248
        %v250 = vlaneseq
        %v251 = vshrl.u32 %v250, 7
        %v252 = vsub.s32 1, %v251
        %v253 = vrot.slane %v209, %v252
        %v254 = vlaneseq
        %v255 = vshrl.u32 %v254, 7
        %v256 = vsub.s32 1, %v255
        %v257 = vrot.slane %v210, %v256
        %v258 = vmul.f32 %v240, %v245
        %v259 = vmul.f32 %v240, %v249
        %v260 = vmul.f32 %v240, %v253
        %v261 = vmul.f32 %v240, %v257
        %v262 = vadd.f32 %v234, %v258
        %v263 = vadd.f32 %v235, %v259
        %v264 = vadd.f32 %v236, %v260
        %v265 = vadd.f32 %v237, %v261
        %266 = vset.pattern.permute.xlu0 2
        %267 = vperm.xlu0 %266, %v211
        %v268 = vpop.permute.xlu0 %267
        %v270 = vlaneseq
        %v271 = vshrl.u32 %v270, 7
        %v272 = vsub.s32 2, %v271
        %v273 = vrot.slane %v207, %v272
        %v274 = vlaneseq
        %v275 = vshrl.u32 %v274, 7
        %v276 = vsub.s32 2, %v275
        %v277 = vrot.slane %v208, %v276
        %v278 = vlaneseq
        %v279 = vshrl.u32 %v278, 7
        %v280 = vsub.s32 2, %v279
        %v281 = vrot.slane %v209, %v280
        %v282 = vlaneseq
        %v283 = vshrl.u32 %v282, 7
        %v284 = vsub.s32 2, %v283
        %v285 = vrot.slane %v210, %v284
        %v286 = vmul.f32 %v268, %v273
        %v287 = vmul.f32 %v268, %v277
        %v288 = vmul.f32 %v268, %v281
        %v289 = vmul.f32 %v268, %v285
        %v290 = vadd.f32 %v262, %v286
        %v291 = vadd.f32 %v263, %v287
        %v292 = vadd.f32 %v264, %v288
        %v293 = vadd.f32 %v265, %v289
        %294 = vset.pattern.permute.xlu0 3
        %295 = vperm.xlu0 %294, %v211
        %v296 = vpop.permute.xlu0 %295
        %v298 = vlaneseq
        %v299 = vshrl.u32 %v298, 7
        %v300 = vsub.s32 3, %v299
        %v301 = vrot.slane %v207, %v300
        %v302 = vlaneseq
        %v303 = vshrl.u32 %v302, 7
        %v304 = vsub.s32 3, %v303
        %v305 = vrot.slane %v208, %v304
        %v306 = vlaneseq
        %v307 = vshrl.u32 %v306, 7
        %v308 = vsub.s32 3, %v307
        %v309 = vrot.slane %v209, %v308
        %v310 = vlaneseq
        %v311 = vshrl.u32 %v310, 7
        %v312 = vsub.s32 3, %v311
        %v313 = vrot.slane %v210, %v312
        %v314 = vmul.f32 %v296, %v301
        %v315 = vmul.f32 %v296, %v305
        %v316 = vmul.f32 %v296, %v309
        %v317 = vmul.f32 %v296, %v313
        %v318 = vadd.f32 %v290, %v314
        %v319 = vadd.f32 %v291, %v315
        %v320 = vadd.f32 %v292, %v316
        %v321 = vadd.f32 %v293, %v317
        %322 = vset.pattern.permute.xlu0 4
        %323 = vperm.xlu0 %322, %v211
        %v324 = vpop.permute.xlu0 %323
        %v326 = vlaneseq
        %v327 = vshrl.u32 %v326, 7
        %v328 = vsub.s32 4, %v327
        %v329 = vrot.slane %v207, %v328
        %v330 = vlaneseq
        %v331 = vshrl.u32 %v330, 7
        %v332 = vsub.s32 4, %v331
        %v333 = vrot.slane %v208, %v332
        %v334 = vlaneseq
        %v335 = vshrl.u32 %v334, 7
        %v336 = vsub.s32 4, %v335
        %v337 = vrot.slane %v209, %v336
        %v338 = vlaneseq
        %v339 = vshrl.u32 %v338, 7
        %v340 = vsub.s32 4, %v339
        %v341 = vrot.slane %v210, %v340
        %v342 = vmul.f32 %v324, %v329
        %v343 = vmul.f32 %v324, %v333
        %v344 = vmul.f32 %v324, %v337
        %v345 = vmul.f32 %v324, %v341
        %v346 = vadd.f32 %v318, %v342
        %v347 = vadd.f32 %v319, %v343
        %v348 = vadd.f32 %v320, %v344
        %v349 = vadd.f32 %v321, %v345
        %350 = vset.pattern.permute.xlu0 5
        %351 = vperm.xlu0 %350, %v211
        %v352 = vpop.permute.xlu0 %351
        %v354 = vlaneseq
        %v355 = vshrl.u32 %v354, 7
        %v356 = vsub.s32 5, %v355
        %v357 = vrot.slane %v207, %v356
        %v358 = vlaneseq
        %v359 = vshrl.u32 %v358, 7
        %v360 = vsub.s32 5, %v359
        %v361 = vrot.slane %v208, %v360
        %v362 = vlaneseq
        %v363 = vshrl.u32 %v362, 7
        %v364 = vsub.s32 5, %v363
        %v365 = vrot.slane %v209, %v364
        %v366 = vlaneseq
        %v367 = vshrl.u32 %v366, 7
        %v368 = vsub.s32 5, %v367
        %v369 = vrot.slane %v210, %v368
        %v370 = vmul.f32 %v352, %v357
        %v371 = vmul.f32 %v352, %v361
        %v372 = vmul.f32 %v352, %v365
        %v373 = vmul.f32 %v352, %v369
        %v374 = vadd.f32 %v346, %v370
        %v375 = vadd.f32 %v347, %v371
        %v376 = vadd.f32 %v348, %v372
        %v377 = vadd.f32 %v349, %v373
        %378 = vset.pattern.permute.xlu0 6
        %379 = vperm.xlu0 %378, %v211
        %v380 = vpop.permute.xlu0 %379
        %v382 = vlaneseq
        %v383 = vshrl.u32 %v382, 7
        %v384 = vsub.s32 6, %v383
        %v385 = vrot.slane %v207, %v384
        %v386 = vlaneseq
        %v387 = vshrl.u32 %v386, 7
        %v388 = vsub.s32 6, %v387
        %v389 = vrot.slane %v208, %v388
        %v390 = vlaneseq
        %v391 = vshrl.u32 %v390, 7
        %v392 = vsub.s32 6, %v391
        %v393 = vrot.slane %v209, %v392
        %v394 = vlaneseq
        %v395 = vshrl.u32 %v394, 7
        %v396 = vsub.s32 6, %v395
        %v397 = vrot.slane %v210, %v396
        %v398 = vmul.f32 %v380, %v385
        %v399 = vmul.f32 %v380, %v389
        %v400 = vmul.f32 %v380, %v393
        %v401 = vmul.f32 %v380, %v397
        %v402 = vadd.f32 %v374, %v398
        %v403 = vadd.f32 %v375, %v399
        %v404 = vadd.f32 %v376, %v400
        %v405 = vadd.f32 %v377, %v401
        %406 = vset.pattern.permute.xlu0 7
        %407 = vperm.xlu0 %406, %v211
        %v408 = vpop.permute.xlu0 %407
        %v410 = vlaneseq
        %v411 = vshrl.u32 %v410, 7
        %v412 = vsub.s32 7, %v411
        %v413 = vrot.slane %v207, %v412
        %v414 = vlaneseq
        %v415 = vshrl.u32 %v414, 7
        %v416 = vsub.s32 7, %v415
        %v417 = vrot.slane %v208, %v416
        %v418 = vlaneseq
        %v419 = vshrl.u32 %v418, 7
        %v420 = vsub.s32 7, %v419
        %v421 = vrot.slane %v209, %v420
        %v422 = vlaneseq
        %v423 = vshrl.u32 %v422, 7
        %v424 = vsub.s32 7, %v423
        %v425 = vrot.slane %v210, %v424
        %v426 = vmul.f32 %v408, %v413
        %v427 = vmul.f32 %v408, %v417
        %v428 = vmul.f32 %v408, %v421
        %v429 = vmul.f32 %v408, %v425
        %v430 = vadd.f32 %v402, %v426
        %v431 = vadd.f32 %v403, %v427
        %v432 = vadd.f32 %v404, %v428
        %v433 = vadd.f32 %v405, %v429
        %435 = vset.pattern.permute.xlu0 0
        %436 = vperm.xlu0 %435, %v212
        %v437 = vpop.permute.xlu0 %436
        %v439 = vadd.f32 %v430, %v437
        %v440 = vadd.f32 %v431, %v437
        %v441 = vadd.f32 %v432, %v437
        %v442 = vadd.f32 %v433, %v437
        %vm443 = vcmask 1043456
        %v444 = vsel %vm443, %v439, -inf
        %v445 = vrot.slane %v444, 4
        %v446 = vmax.f32 %v444, %v445
        %v447 = vrot.slane %v446, 2
        %v448 = vmax.f32 %v446, %v447
        %v449 = vrot.slane %v448, 1
        %v450 = vmax.f32 %v448, %v449
        %v451 = vsel %vm443, %v440, -inf
        %v452 = vrot.slane %v451, 4
        %v453 = vmax.f32 %v451, %v452
        %v454 = vrot.slane %v453, 2
        %v455 = vmax.f32 %v453, %v454
        %v456 = vrot.slane %v455, 1
        %v457 = vmax.f32 %v455, %v456
        %v458 = vsel %vm443, %v441, -inf
        %v459 = vrot.slane %v458, 4
        %v460 = vmax.f32 %v458, %v459
        %v461 = vrot.slane %v460, 2
        %v462 = vmax.f32 %v460, %v461
        %v463 = vrot.slane %v462, 1
        %v464 = vmax.f32 %v462, %v463
        %v465 = vsel %vm443, %v442, -inf
        %v466 = vrot.slane %v465, 4
        %v467 = vmax.f32 %v465, %v466
        %v468 = vrot.slane %v467, 2
        %v469 = vmax.f32 %v467, %v468
        %v470 = vrot.slane %v469, 1
        %v471 = vmax.f32 %v469, %v470
        %v472 = vsub.f32 %v439, %v450
        %v473 = vsub.f32 %v440, %v457
        %v474 = vsub.f32 %v441, %v464
        %v475 = vsub.f32 %v442, %v471
        %v476 = vmul.f32 %v472, 1.442695
        %v477 = vpow.pop %v476
        %v478 = vmul.f32 %v473, 1.442695
        %v479 = vpow.pop %v478
        %v480 = vmul.f32 %v474, 1.442695
        %v481 = vpow.pop %v480
        %v482 = vmul.f32 %v475, 1.442695
        %v483 = vpow.pop %v482
        %v484 = vsel %vm443, %v477, 0.0
        %v485 = vrot.slane %v484, 4
        %v486 = vadd.f32 %v484, %v485
        %v487 = vrot.slane %v486, 2
        %v488 = vadd.f32 %v486, %v487
        %v489 = vrot.slane %v488, 1
        %v490 = vadd.f32 %v488, %v489
        %v491 = vsel %vm443, %v479, 0.0
        %v492 = vrot.slane %v491, 4
        %v493 = vadd.f32 %v491, %v492
        %v494 = vrot.slane %v493, 2
        %v495 = vadd.f32 %v493, %v494
        %v496 = vrot.slane %v495, 1
        %v497 = vadd.f32 %v495, %v496
        %v498 = vsel %vm443, %v481, 0.0
        %v499 = vrot.slane %v498, 4
        %v500 = vadd.f32 %v498, %v499
        %v501 = vrot.slane %v500, 2
        %v502 = vadd.f32 %v500, %v501
        %v503 = vrot.slane %v502, 1
        %v504 = vadd.f32 %v502, %v503
        %v505 = vsel %vm443, %v483, 0.0
        %v506 = vrot.slane %v505, 4
        %v507 = vadd.f32 %v505, %v506
        %v508 = vrot.slane %v507, 2
        %v509 = vadd.f32 %v507, %v508
        %v510 = vrot.slane %v509, 1
        %v511 = vadd.f32 %v509, %v510
        %v512 = vrcp.pop %v490
        %v513 = vrcp.pop %v497
        %v514 = vrcp.pop %v504
        %v515 = vrcp.pop %v511
        %v516 = vmul.f32 %v477, %v512
        %v517 = vmul.f32 %v479, %v513
        %v518 = vmul.f32 %v481, %v514
        %v519 = vmul.f32 %v483, %v515
        %v524 = vcombine.low %v516, %v517
        %v525 = vcombine.low %v518, %v519
        %528 = vst [vmem:[%s204] sm:$0xff] %v524
        %529 = vst [vmem:[%s204 + $0x8] sm:$0xff] %v525
        %s530 = sand.u32 %s112, 1
        %s531 = scalar_lea.sflag [#allocation4], %s530
        %s532 = sand.u32 %s112, 1
        %s533 = smul.addr %s532, 16
        %s534 = scalar_lea.vmem [#allocation5], %s533
        // Predicated region
        $region37: #{tpu_custom_call.1} parent=31 // pred_check
          %p535 = pneg %p122
        $region38: #{tpu_custom_call.1} parent=31 // pred_check_branch
          %537 = sbr.rel (%p535) target = $region40
        $region39: #{tpu_custom_call.1} parent=31 // pred_region
          %s538 = smul.u32 4, %s25
          %s540 = ssub.s32 256, 256
          %541 = vsyncadd %s531, %s540
          %s542 = smul.addr %s24, 4
          %s543 = sadd.s32 %s538, %s542
          %s544 = smul.addr %s543, 64
          %s545 = scalar_lea.hbm %s3, %s544
          %s547 = sshll.u32 %s534, 4
          %s548 = int_to_ptr.vmem [resolvable:$true] %s547
          %550 = dma.vmem_to_hbm [thread:$0]  %s548, 256, %s545, %s531
        $region40: #{tpu_custom_call.1} parent=31 // pred_fallthru
          _
      $region32: #{tpu_custom_call.1} parent=5 // pred_fallthru
        _
      %p551 = scmp.le.s32.totalorder 2, %s15
      // Predicated region
      $region41: #{tpu_custom_call.1} parent=5 // pred_check
        %p552 = pneg %p551
      $region42: #{tpu_custom_call.1} parent=5 // pred_check_branch
        %554 = sbr.rel (%p552) target = $region44
      $region43: #{tpu_custom_call.1} parent=5 // pred_region
        %s555 = ssub.s32 %s15, 2
        // Predicated region
        $region45: #{tpu_custom_call.1} parent=43 // pred_check
          %p556 = pneg %p128
        $region46: #{tpu_custom_call.1} parent=43 // pred_check_branch
          %558 = sbr.rel (%p556) target = $region48
        $region47: #{tpu_custom_call.1} parent=43 // pred_region
          %s559 = sand.u32 %s113, 1
          %s560 = scalar_lea.sflag [#allocation4], %s559
          %s561 = sand.u32 %s113, 1
          %s562 = smul.addr %s561, 16
          %s563 = scalar_lea.vmem [#allocation5], %s562
          %564 = dma.done %s560, 256
        $region48: #{tpu_custom_call.1} parent=43 // pred_fallthru
          _
      $region44: #{tpu_custom_call.1} parent=5 // pred_fallthru
        _
    $region6: #{tpu_custom_call.1} parent=1 // loop_footer
      %s19 = sadd.s32 1, %s15
    $region7: #{tpu_custom_call.1} parent=1 // loop_footer_branch
      %14 = sbr.rel target = $region3
    $region8: #{tpu_custom_call.1} parent=1 // loop_exit
      _
    %565 = vsyncpa [#allocation3], 1
    %s566 = scalar_lea.sflag [#allocation3], 1
    %567 = vsyncpa %s566, 1
    %568 = vsyncpa [#allocation4], 1
    %s569 = scalar_lea.sflag [#allocation4], 1
    %570 = vsyncpa %s569, 1

</llo_original>
